<compile_context>
chip_gen: v6e
topology: v6e:2x2x1
jax: 0.10.0
libtpu: 0.0.40
codegen_flags: <defaults>
</compile_context>

<pallas_src>
import math
from functools import partial

import jax
import jax.numpy as jnp
from jax.experimental import pallas as pl
from jax.experimental.pallas import tpu as pltpu


# ----------------------------------------------------------------------------
# Helpers
# ----------------------------------------------------------------------------
def _pick_tile(total, cap, multiple=8):
    """Largest tile <= cap dividing `total` (preferring multiples of `multiple`).
    Raises instead of silently returning a full-extent block that could blow VMEM."""
    if total <= cap:
        return total
    fallback = None
    for t in range(min(cap, total), 0, -1):
        if total % t == 0:
            if t % multiple == 0:
                return t
            if fallback is None:
                fallback = t
    if fallback is not None and fallback >= multiple:
        return fallback
    raise ValueError(
        f"_pick_tile: no tile <= {cap} divides {total}; pad the input or pick a "
        f"different cap (refusing silent full-extent fallback).")


def _pick_head_group(num_heads, head_dim):
    """Smallest group of heads whose combined lane width is a multiple of 128;
    falls back to all heads (full last dim, always a legal block)."""
    for g in range(1, num_heads + 1):
        if num_heads % g == 0 and (g * head_dim) % 128 == 0:
            return g
    return num_heads


# ----------------------------------------------------------------------------
# Plain tiled linear projection: y = x @ W + b  (bf16 MXU, f32 accumulate).
# Activation cast to bf16 happens in-kernel (not a wrapper-level astype pass).
# ----------------------------------------------------------------------------
def _linear_kernel(x_ref, w_ref, b_ref, o_ref):
    x = x_ref[...].astype(jnp.bfloat16)
    acc = jnp.dot(x, w_ref[...], preferred_element_type=jnp.float32)
    o_ref[...] = (acc + b_ref[...]).astype(o_ref.dtype)


def pallas_linear(x2d, w_t, b2d, out_dtype=jnp.float32, row_tile=1024):
    """x2d: (M, K) f32/bf16, w_t: (K, N) bf16, b2d: (1, N) f32 -> (M, N) out_dtype."""
    M, K = x2d.shape
    N = w_t.shape[1]
    tm = _pick_tile(M, row_tile)
    cost = pl.CostEstimate(
        flops=2 * M * K * N,
        transcendentals=0,
        bytes_accessed=M * K * x2d.dtype.itemsize + K * N * 2 + N * 4
        + M * N * jnp.dtype(out_dtype).itemsize)
    return pl.pallas_call(
        _linear_kernel,
        out_shape=jax.ShapeDtypeStruct((M, N), out_dtype),
        grid=(M // tm,),
        in_specs=[
            pl.BlockSpec((tm, K), lambda i: (i, 0)),
            pl.BlockSpec((K, N), lambda i: (0, 0)),
            pl.BlockSpec((1, N), lambda i: (0, 0)),
        ],
        out_specs=pl.BlockSpec((tm, N), lambda i: (i, 0)),
        compiler_params=pltpu.CompilerParams(dimension_semantics=("parallel",)),
        cost_estimate=cost,
    )(x2d, w_t, b2d)


# ----------------------------------------------------------------------------
# Fused linear projection + RoPE rotation epilogue (Q/K paths).
# Weights are pre-permuted so each head's features are [even-half | odd-half];
# the rotation is then contiguous-slice math.  Q tables carry scale*log2(e).
# Output is bf16 (halves the HBM stream feeding the attention kernel).
# ----------------------------------------------------------------------------
def _linear_rope_kernel(x_ref, w_ref, b_ref, cs_ref, o_ref, *, num_heads, head_dim):
    Dh = head_dim
    Dh2 = Dh // 2
    x = x_ref[...].astype(jnp.bfloat16)
    y = jnp.dot(x, w_ref[...], preferred_element_type=jnp.float32) + b_ref[...]
    c = cs_ref[:, :Dh2]            # cos  (scaled on the Q side)
    s = cs_ref[:, Dh2:]            # sin  (scaled on the Q side)
    parts = []
    for h in range(num_heads):     # once per token; hides under MXU/DMA slack
        off = h * Dh
        ye = y[:, off:off + Dh2]
        yo = y[:, off + Dh2:off + Dh]
        parts.append(ye * c - yo * s)
        parts.append(ye * s + yo * c)
    o_ref[...] = jnp.concatenate(parts, axis=-1).astype(o_ref.dtype)


def pallas_linear_rope(x2d, w_t, b2d, cs, *, seq_len, num_heads, head_dim,
                       row_tile=1024):
    """x2d: (B*seq_len, K) f32, w_t: (K, H*Dh) bf16 (per-head [even|odd] cols),
    b2d: (1, H*Dh) f32, cs: (seq_len, Dh) = [cos|sin] -> rotated bf16 (B*seq_len, H*Dh)."""
    M, K = x2d.shape
    N = w_t.shape[1]
    tm = _pick_tile(seq_len, row_tile)
    assert M % tm == 0
    tiles_per_seq = seq_len // tm
    if tiles_per_seq == 1:
        cs_map = lambda i: (0, 0)
    else:
        cs_map = lambda i: (i % tiles_per_seq, 0)
    kernel = partial(_linear_rope_kernel, num_heads=num_heads, head_dim=head_dim)
    cost = pl.CostEstimate(
        flops=2 * M * K * N + 6 * M * N,
        transcendentals=0,
        bytes_accessed=M * K * 4 + K * N * 2 + N * 4 + seq_len * head_dim * 4 + M * N * 2)
    return pl.pallas_call(
        kernel,
        out_shape=jax.ShapeDtypeStruct((M, N), jnp.bfloat16),
        grid=(M // tm,),
        in_specs=[
            pl.BlockSpec((tm, K), lambda i: (i, 0)),
            pl.BlockSpec((K, N), lambda i: (0, 0)),
            pl.BlockSpec((1, N), lambda i: (0, 0)),
            pl.BlockSpec((tm, head_dim), cs_map),
        ],
        out_specs=pl.BlockSpec((tm, N), lambda i: (i, 0)),
        compiler_params=pltpu.CompilerParams(dimension_semantics=("parallel",)),
        cost_estimate=cost,
    )(x2d, w_t, b2d, cs)


# ----------------------------------------------------------------------------
# Flash-style attention over pre-rotated / pre-scaled bf16 Q, K and bf16 V.
# grid = (B, head_groups, Q_tiles, KV_tiles); KV axis is the reduction.
# ----------------------------------------------------------------------------
def _flash_attn_kernel(q_ref, k_ref, v_ref, o_ref, m_sc, l_sc, acc_sc,
                       *, heads_per_block, head_dim):
    G, Dh = heads_per_block, head_dim
    ki = pl.program_id(3)

    @pl.when(ki == 0)
    def _init():
        m_sc[...] = jnp.full_like(m_sc, -jnp.inf)
        l_sc[...] = jnp.zeros_like(l_sc)
        acc_sc[...] = jnp.zeros_like(acc_sc)

    q = q_ref[0]                    # (tq, G*Dh) bf16, rotated & scaled by scale*log2e
    k = k_ref[0]                    # (tk, G*Dh) bf16, rotated
    v = v_ref[0]                    # (tk, G*Dh) bf16, natural order

    alphas = []
    pvs = []
    for g in range(G):
        off = g * Dh
        s = jnp.einsum("qd,kd->qk", q[:, off:off + Dh], k[:, off:off + Dh],
                       preferred_element_type=jnp.float32)          # (tq, tk)
        m_prev = m_sc[g]
        m_new = jnp.maximum(m_prev, jnp.max(s, axis=-1, keepdims=True))
        alpha = jnp.exp2(m_prev - m_new)        # log2(e) already folded into q scale
        p = jnp.exp2(s - m_new)
        l_sc[g] = alpha * l_sc[g] + jnp.sum(p, axis=-1, keepdims=True)
        m_sc[g] = m_new
        pv = jnp.dot(p.astype(jnp.bfloat16), v[:, off:off + Dh],
                     preferred_element_type=jnp.float32)             # (tq, Dh)
        alphas.append(jnp.broadcast_to(alpha, pv.shape))
        pvs.append(pv)

    # Single lane-dense accumulator update for the whole head group.
    acc_sc[...] = (jnp.concatenate(alphas, axis=-1) * acc_sc[...]
                   + jnp.concatenate(pvs, axis=-1))

    @pl.when(ki == pl.num_programs(3) - 1)
    def _finalize():
        tq = acc_sc.shape[0]
        inv = jnp.concatenate(
            [jnp.broadcast_to(pl.reciprocal(l_sc[g], approx=True), (tq, Dh))
             for g in range(G)], axis=-1)
        o_ref[0] = (acc_sc[...] * inv).astype(o_ref.dtype)


def pallas_flash_attention(qp, kp, vp, *, num_heads, head_dim,
                           q_tile=512, kv_tile=1024):
    """qp/kp: (B, Nq/Nk, H*Dh) bf16 (rotated; Q also scaled), vp: (B, Nk, H*Dh) bf16.
    Returns (B, Nq, H*Dh) bf16."""
    B, Nq, HD = qp.shape
    Nk = kp.shape[1]
    Dh = head_dim
    G = _pick_head_group(num_heads, Dh)
    HG = num_heads // G
    GW = G * Dh
    tq = _pick_tile(Nq, q_tile)
    tk = _pick_tile(Nk, kv_tile)
    kernel = partial(_flash_attn_kernel, heads_per_block=G, head_dim=Dh)
    cost = pl.CostEstimate(
        flops=4 * B * num_heads * Nq * Nk * Dh,
        transcendentals=B * num_heads * Nq * Nk,
        bytes_accessed=2 * (2 * B * Nq * HD + 2 * B * Nk * HD))
    return pl.pallas_call(
        kernel,
        out_shape=jax.ShapeDtypeStruct((B, Nq, HD), jnp.bfloat16),
        grid=(B, HG, Nq // tq, Nk // tk),
        in_specs=[
            pl.BlockSpec((1, tq, GW), lambda b, hg, qi, ki: (b, qi, hg)),   # q
            pl.BlockSpec((1, tk, GW), lambda b, hg, qi, ki: (b, ki, hg)),   # k
            pl.BlockSpec((1, tk, GW), lambda b, hg, qi, ki: (b, ki, hg)),   # v
        ],
        out_specs=pl.BlockSpec((1, tq, GW), lambda b, hg, qi, ki: (b, qi, hg)),
        scratch_shapes=[
            pltpu.VMEM((G, tq, 1), jnp.float32),    # running max (per head in group)
            pltpu.VMEM((G, tq, 1), jnp.float32),    # running denominator
            pltpu.VMEM((tq, GW), jnp.float32),      # lane-dense output accumulator
        ],
        compiler_params=pltpu.CompilerParams(
            dimension_semantics=("parallel", "parallel", "parallel", "arbitrary")),
        cost_estimate=cost,
    )(qp, kp, vp)


# ----------------------------------------------------------------------------
# One-time parameter prep: transpose, bf16-cast, and per-head [even|odd]
# column permutation of the q/k projections (no strided slicing at runtime).
# ----------------------------------------------------------------------------
def prepare_params(params, num_heads):
    Wq, bq, Wk, bk, Wv, bv, Wo, bo = params      # torch-style W: (out, in)
    internal_dim = Wq.shape[0]
    Dh = internal_dim // num_heads
    perm = jnp.concatenate([
        jnp.concatenate([jnp.arange(h * Dh, (h + 1) * Dh, 2),
                         jnp.arange(h * Dh + 1, (h + 1) * Dh, 2)])
        for h in range(num_heads)])

    def prep(W, b, p=None):
        Wt = W.T                                 # (in, out)
        if p is not None:
            Wt = Wt[:, p]
            b = b[p]
        return Wt.astype(jnp.bfloat16), b.reshape(1, -1).astype(jnp.float32)

    return dict(q=prep(Wq, bq, perm), k=prep(Wk, bk, perm),
                v=prep(Wv, bv), o=prep(Wo, bo),
                num_heads=num_heads, head_dim=Dh, internal_dim=internal_dim)


# ----------------------------------------------------------------------------
# Axial (2D) RoPE tables — built once, outside the per-call path.
# Q table carries softmax_scale * log2(e) (for the exp2 online softmax).
# ----------------------------------------------------------------------------
def axial_rope_cos_sin(head_dim, end_x, end_y, theta=10000.0):
    d4 = head_dim // 4
    exps = jnp.arange(0, head_dim, 4, dtype=jnp.float32)[:d4] / head_dim
    freqs = 1.0 / (theta ** exps)
    t = jnp.arange(end_x * end_y, dtype=jnp.float32)
    t_x = t % end_x
    t_y = jnp.floor(t / end_x)
    ang = jnp.concatenate([jnp.outer(t_x, freqs), jnp.outer(t_y, freqs)], axis=-1)
    return jnp.cos(ang), jnp.sin(ang)            # (N, head_dim//2)


def make_rope_tables(head_dim, num_q, num_k, *, theta=10000.0,
                     num_k_exclude_rope=0, rope_k_repeat=False):
    side = int(round(math.sqrt(num_q)))
    assert side * side == num_q, "RoPEAttention expects a square query token grid"
    cos_q, sin_q = axial_rope_cos_sin(head_dim, side, side, theta)
    # SDPA softmax scale, plus log2(e) so the kernel can use exp2.
    scale = (1.0 / math.sqrt(head_dim)) * math.log2(math.e)

    num_k_rope = num_k - num_k_exclude_rope
    if num_k_rope == num_q:
        cos_kr, sin_kr = cos_q, sin_q
    elif rope_k_repeat:
        r = num_k_rope // num_q
        cos_kr, sin_kr = jnp.tile(cos_q, (r, 1)), jnp.tile(sin_q, (r, 1))
    else:
        cos_kr, sin_kr = cos_q[:num_k_rope], sin_q[:num_k_rope]
    pad = num_k - num_k_rope
    d2 = head_dim // 2
    cos_k = jnp.concatenate([cos_kr, jnp.ones((pad, d2), jnp.float32)], 0)   # identity rows
    sin_k = jnp.concatenate([sin_kr, jnp.zeros((pad, d2), jnp.float32)], 0)

    cs_q = jnp.concatenate([cos_q * scale, sin_q * scale], axis=-1)   # (Nq, Dh)
    cs_k = jnp.concatenate([cos_k, sin_k], axis=-1)                   # (Nk, Dh)
    return cs_q, cs_k


# ----------------------------------------------------------------------------
# Full RoPEAttention forward (projections + RoPE + attention + output proj)
# ----------------------------------------------------------------------------
def rope_attention_forward(q, k, v, prepped, cs_q, cs_k):
    H = prepped["num_heads"]
    Dh = prepped["head_dim"]
    ID = prepped["internal_dim"]
    B, Nq, _ = q.shape
    Nk = k.shape[1]
    Wq, bq = prepped["q"]
    Wk, bk = prepped["k"]
    Wv, bv = prepped["v"]
    Wo, bo = prepped["o"]

    # Q/K projections with fused RoPE rotation (Q also pre-scaled); bf16 streams.
    qp = pallas_linear_rope(q.reshape(B * Nq, -1), Wq, bq, cs_q,
                            seq_len=Nq, num_heads=H, head_dim=Dh).reshape(B, Nq, ID)
    kp = pallas_linear_rope(k.reshape(B * Nk, -1), Wk, bk, cs_k,
                            seq_len=Nk, num_heads=H, head_dim=Dh).reshape(B, Nk, ID)
    vp = pallas_linear(v.reshape(B * Nk, -1), Wv, bv,
                       out_dtype=jnp.bfloat16).reshape(B, Nk, ID)

    # Flash attention over (B, head-groups, Nq tiles, KV tiles); bf16 output.
    out = pallas_flash_attention(qp, kp, vp, num_heads=H, head_dim=Dh)

    # Output projection (bf16 in, f32 out).
    out = pallas_linear(out.reshape(B * Nq, ID), Wo, bo, out_dtype=jnp.float32)
    return out.reshape(B, Nq, -1)


# ----------------------------------------------------------------------------
# Pure-JAX f32 reference (mirrors the PyTorch module, complex RoPE formulation)
# ----------------------------------------------------------------------------
def ref_forward(q, k, v, params, *, num_heads, rope_theta=10000.0):
    Wq, bq, Wk, bk, Wv, bv, Wo, bo = params
    B, Nq, _ = q.shape
    Nk = k.shape[1]
    internal_dim = Wq.shape[0]
    Dh = internal_dim // num_heads

    qp = q @ Wq.T + bq
    kp = k @ Wk.T + bk
    vp = v @ Wv.T + bv
    sep = lambda x, n: x.reshape(B, n, num_heads, Dh).transpose(0, 2, 1, 3)
    qh, kh, vh = sep(qp, Nq), sep(kp, Nk), sep(vp, Nk)

    side = int(round(math.sqrt(Nq)))
    cos, sin = axial_rope_cos_sin(Dh, side, side, rope_theta)
    fc = cos + 1j * sin                                          # (N, Dh/2)

    def rot(x):
        xe, xo = x[..., 0::2], x[..., 1::2]
        xc = (xe + 1j * xo) * fc
        out = jnp.stack([jnp.real(xc), jnp.imag(xc)], axis=-1)
        return out.reshape(x.shape)

    qh, kh = rot(qh), rot(kh)
    scale = 1.0 / math.sqrt(Dh)
    s = jnp.einsum("bhqd,bhkd->bhqk", qh, kh) * scale
    p = jax.nn.softmax(s, axis=-1)
    o = jnp.einsum("bhqk,bhkd->bhqd", p, vh)
    o = o.transpose(0, 2, 1, 3).reshape(B, Nq, internal_dim)
    return o @ Wo.T + bo


# ----------------------------------------------------------------------------
if __name__ == "__main__":
    # Small config: embedding_dim=32, num_heads=2 -> head_dim=16; seq=64 (8x8 grid)
    B, N, E, H = 2, 64, 32, 2
    key = jax.random.PRNGKey(0)
    ks = jax.random.split(key, 11)

    def w(kk, shape):
        return jax.random.normal(kk, shape, jnp.float32) * 0.05

    params = (
        w(ks[0], (E, E)), w(ks[1], (E,)),   # q_proj
        w(ks[2], (E, E)), w(ks[3], (E,)),   # k_proj
        w(ks[4], (E, E)), w(ks[5], (E,)),   # v_proj
        w(ks[6], (E, E)), w(ks[7], (E,)),   # out_proj
    )
    q = jax.random.normal(ks[8], (B, N, E), jnp.float32)
    k = jax.random.normal(ks[9], (B, N, E), jnp.float32)
    v = jax.random.normal(ks[10], (B, N, E), jnp.float32)

    # One-time prep (weight permutation + bf16 cast, RoPE tables with scale*log2e).
    prepped = prepare_params(params, num_heads=H)
    cs_q, cs_k = make_rope_tables(E // H, N, N,
                                  num_k_exclude_rope=0, rope_k_repeat=False)

    out = rope_attention_forward(q, k, v, prepped, cs_q, cs_k)
    out = jax.block_until_ready(out)

    ref = ref_forward(q, k, v, params, num_heads=H)
    assert out.shape == (B, N, E)
    err = float(jnp.max(jnp.abs(out - ref)))
    # Tolerance budget: bf16 Q/K/V/P streams + bf16 attention output + approx reciprocal.
    assert err < 2e-2, f"mismatch vs JAX reference: max abs err = {err}"

    print("KERNEL_OK")
</pallas_src>

<mosaic_0001>
module attributes {stable_mosaic.version = 11 : i64} {
  func.func @_linear_rope_kernel(%arg0: i32, %arg1: memref<64x32xf32, #tpu.memory_space<vmem>>, %arg2: memref<32x32xbf16, #tpu.memory_space<vmem>>, %arg3: memref<1x32xf32, #tpu.memory_space<vmem>>, %arg4: memref<64x16xf32, #tpu.memory_space<vmem>>, %arg5: memref<64x32xbf16, #tpu.memory_space<vmem>>) attributes {dimension_semantics = [#tpu.dimension_semantics<parallel>], iteration_bounds = array<i64: 2>, scalar_prefetch = 0 : i64, scratch_operands = 0 : i64, tpu.core_type = #tpu.core_type<tc>, window_params = [{transform_indices = @transform_0, window_bounds = array<i64: 64, 32>}, {pipeline_mode = #tpu.pipeline_mode<synchronous>, transform_indices = @transform_1, window_bounds = array<i64: 32, 32>}, {pipeline_mode = #tpu.pipeline_mode<synchronous>, transform_indices = @transform_2, window_bounds = array<i64: 1, 32>}, {pipeline_mode = #tpu.pipeline_mode<synchronous>, transform_indices = @transform_3, window_bounds = array<i64: 64, 16>}, {transform_indices = @transform_4, window_bounds = array<i64: 64, 32>}]} {
    %c0 = arith.constant 0 : index
    %c0_0 = arith.constant 0 : index
    %0 = vector.load %arg1[%c0, %c0_0] : memref<64x32xf32, #tpu.memory_space<vmem>>, vector<64x32xf32>
    %1 = arith.truncf %0 : vector<64x32xf32> to vector<64x32xbf16>
    %c0_1 = arith.constant 0 : index
    %c0_2 = arith.constant 0 : index
    %2 = vector.load %arg2[%c0_1, %c0_2] : memref<32x32xbf16, #tpu.memory_space<vmem>>, vector<32x32xbf16>
    %cst = arith.constant dense<0.000000e+00> : vector<64x32xf32>
    %3 = tpu.matmul %1, %2, %cst {dimension_numbers = #tpu.dot_dimension_numbers<[1], [0], [0], [1], [0, 0, 1, 1], [], []>} : vector<64x32xbf16>, vector<32x32xbf16>, vector<64x32xf32> -> vector<64x32xf32>
    %c0_3 = arith.constant 0 : index
    %c0_4 = arith.constant 0 : index
    %4 = vector.load %arg3[%c0_3, %c0_4] : memref<1x32xf32, #tpu.memory_space<vmem>>, vector<1x32xf32>
    %5 = vector.broadcast %4 : vector<1x32xf32> to vector<64x32xf32>
    %6 = arith.addf %3, %5 : vector<64x32xf32>
    %c0_5 = arith.constant 0 : index
    %c0_6 = arith.constant 0 : index
    %7 = vector.load %arg4[%c0_5, %c0_6] : memref<64x16xf32, #tpu.memory_space<vmem>>, vector<64x8xf32>
    %c0_7 = arith.constant 0 : index
    %c8 = arith.constant 8 : index
    %8 = vector.load %arg4[%c0_7, %c8] : memref<64x16xf32, #tpu.memory_space<vmem>>, vector<64x8xf32>
    %9 = vector.extract_strided_slice %6 {offsets = [0, 0], sizes = [64, 8], strides = [1, 1]} : vector<64x32xf32> to vector<64x8xf32>
    %10 = vector.extract_strided_slice %6 {offsets = [0, 8], sizes = [64, 8], strides = [1, 1]} : vector<64x32xf32> to vector<64x8xf32>
    %11 = arith.mulf %9, %7 : vector<64x8xf32>
    %12 = arith.mulf %10, %8 : vector<64x8xf32>
    %13 = arith.subf %11, %12 : vector<64x8xf32>
    %14 = arith.mulf %9, %8 : vector<64x8xf32>
    %15 = arith.mulf %10, %7 : vector<64x8xf32>
    %16 = arith.addf %14, %15 : vector<64x8xf32>
    %17 = vector.extract_strided_slice %6 {offsets = [0, 16], sizes = [64, 8], strides = [1, 1]} : vector<64x32xf32> to vector<64x8xf32>
    %18 = vector.extract_strided_slice %6 {offsets = [0, 24], sizes = [64, 8], strides = [1, 1]} : vector<64x32xf32> to vector<64x8xf32>
    %19 = arith.mulf %17, %7 : vector<64x8xf32>
    %20 = arith.mulf %18, %8 : vector<64x8xf32>
    %21 = arith.subf %19, %20 : vector<64x8xf32>
    %22 = arith.mulf %17, %8 : vector<64x8xf32>
    %23 = arith.mulf %18, %7 : vector<64x8xf32>
    %24 = arith.addf %22, %23 : vector<64x8xf32>
    %25 = tpu.concatenate %13, %16, %21, %24 in 1 : vector<64x8xf32>, vector<64x8xf32>, vector<64x8xf32>, vector<64x8xf32> -> vector<64x32xf32>
    %26 = arith.truncf %25 : vector<64x32xf32> to vector<64x32xbf16>
    %c0_8 = arith.constant 0 : index
    %c0_9 = arith.constant 0 : index
    %27 = vector.load %arg5[%c0_8, %c0_9] : memref<64x32xbf16, #tpu.memory_space<vmem>>, vector<64x32xbf16>
    tpu.vector_store %arg5[%c0_8, %c0_9], %26 {strides = array<i32>} : memref<64x32xbf16, #tpu.memory_space<vmem>>, vector<64x32xbf16>,
    return
  }
  func.func @transform_0(%arg0: i32) -> (i32, i32) {
    %c0_i32 = arith.constant 0 : i32
    %c0_i32_0 = arith.constant 0 : i32
    return %arg0, %c0_i32 : i32, i32
  }
  func.func @transform_1(%arg0: i32) -> (i32, i32) {
    %c0_i32 = arith.constant 0 : i32
    %c0_i32_0 = arith.constant 0 : i32
    %c0_i32_1 = arith.constant 0 : i32
    return %c0_i32, %c0_i32_0 : i32, i32
  }
  func.func @transform_2(%arg0: i32) -> (i32, i32) {
    %c0_i32 = arith.constant 0 : i32
    %c0_i32_0 = arith.constant 0 : i32
    %c0_i32_1 = arith.constant 0 : i32
    return %c0_i32, %c0_i32_0 : i32, i32
  }
  func.func @transform_3(%arg0: i32) -> (i32, i32) {
    %c0_i32 = arith.constant 0 : i32
    %c0_i32_0 = arith.constant 0 : i32
    %c0_i32_1 = arith.constant 0 : i32
    return %c0_i32, %c0_i32_0 : i32, i32
  }
  func.func @transform_4(%arg0: i32) -> (i32, i32) {
    %c0_i32 = arith.constant 0 : i32
    %c0_i32_0 = arith.constant 0 : i32
    return %arg0, %c0_i32 : i32, i32
  }
}

</mosaic_0001>

<llo_original>
// kernel: tpu_custom_call.1
$region0: #{tpu_custom_call.1}
  #allocation0 [shape = 'u32[]', space=smem, size = 0x4, offset = 0x4, fixed_abs, tag = 'smem constant byte address 0x4 - core index']
  #allocation1 [shape = 'u32[144,128]{1,0:T(1,128)}', space=vmem, size = 0x12000, scoped, tag = 'internal scratch']
  %s0 = inlined_call_operand.vmem [shape: f32[128,32], index: 0, kind: input, shape index: {}]
  %s1 = inlined_call_operand.vmem [shape: bf16[32,32], index: 1, kind: input, shape index: {}]
  %s2 = inlined_call_operand.vmem [shape: f32[1,32], index: 2, kind: input, shape index: {}]
  %s3 = inlined_call_operand.vmem [shape: f32[64,16], index: 3, kind: input, shape index: {}]
  %s4 = inlined_call_operand.vmem [shape: bf16[128,32], index: 4, kind: output, shape index: {}]
  %s5 = sld [smem:[#allocation0]]
  $region49: #{tpu_custom_call.1} parent=0
    _
  %s7 = ssub.s32 1, %s5
  %s8 = scalar_select 0, %s7, %s5
  loop: start=0, step=1, limit=4
  $region2: #{tpu_custom_call.1} parent=0 // loop_pre_header
    _
  $region3: #{tpu_custom_call.1} parent=0 // loop_header
    %s10 = sphi 0, %s14
    %p11 = scmp.ge.s32.totalorder %s10, 4
    %s20 = sphi 0, %s22
    %s23 = sphi 0, %s20
    %s24 = sphi 0, %s23
    %s40 = sphi 0, %s24
    %s44 = sphi 0, %s44
    %s46 = sphi 0, %s44
    %s47 = sphi 0, %s46
    %s61 = sphi 0, %s47
    %s65 = sphi 0, %s65
    %s67 = sphi 0, %s65
    %s68 = sphi 0, %s67
    %s82 = sphi 0, %s68
    %s86 = sphi 0, %s86
    %s88 = sphi 0, %s86
    %s89 = sphi 0, %s88
    %s103 = sphi 0, %s89
    %s109 = sphi 0, %s111
    %s112 = sphi 0, %s109
    %s113 = sphi 0, %s112
    %s129 = sphi 0, %s113
  $region4: #{tpu_custom_call.1} parent=0 // loop_header_branch
    %13 = sbr.rel (%p11) target = $region8
  $region5: #{tpu_custom_call.1} parent=0 // loop_body
    %s15 = ssub.s32 %s10, 1
    %s16 = ssub.s32 %s10, 2
    %s17 = sadd.s32 %s10, 1
    %s18 = ssub.s32 %s10, %s17
    %p19 = scmp.eq.s32.totalorder %s18, 0
    %s21 = sadd.s32 %s20, 1
    %s22 = scalar_select %p19, %s20, %s21
    %p25 = pneg %p19
    %p26 = scmp.eq.s32.totalorder %s10, 1
    %p27 = por %p25, %p26
    %p28 = scmp.ne.s32.totalorder %s20, %s23
    %p29 = scmp.eq.s32.totalorder %s10, 0
    %p30 = por %p28, %p29
    %p31 = scmp.ne.s32.totalorder %s20, %s23
    %p32 = scmp.eq.s32.totalorder %s15, 1
    %p33 = por %p31, %p32
    %p34 = scmp.ne.s32.totalorder %s23, %s24
    %p35 = scmp.eq.s32.totalorder %s15, 0
    %p36 = por %p34, %p35
    %p37 = scmp.ne.s32.totalorder %s23, %s24
    %p38 = scmp.eq.s32.totalorder %s16, 1
    %p39 = por %p37, %p38
    %p41 = scmp.ne.s32.totalorder %s24, %s40
    %p42 = scmp.eq.s32.totalorder %s16, 0
    %p43 = por %p41, %p42
    %s45 = sadd.s32 %s44, 1
    %p48 = scmp.eq.s32.totalorder %s10, 1
    %p49 = scmp.ne.s32.totalorder %s44, %s46
    %p50 = scmp.eq.s32.totalorder %s10, 0
    %p51 = por %p49, %p50
    %p52 = scmp.ne.s32.totalorder %s44, %s46
    %p53 = scmp.eq.s32.totalorder %s15, 1
    %p54 = por %p52, %p53
    %p55 = scmp.ne.s32.totalorder %s46, %s47
    %p56 = scmp.eq.s32.totalorder %s15, 0
    %p57 = por %p55, %p56
    %p58 = scmp.ne.s32.totalorder %s46, %s47
    %p59 = scmp.eq.s32.totalorder %s16, 1
    %p60 = por %p58, %p59
    %p62 = scmp.ne.s32.totalorder %s47, %s61
    %p63 = scmp.eq.s32.totalorder %s16, 0
    %p64 = por %p62, %p63
    %s66 = sadd.s32 %s65, 1
    %p69 = scmp.eq.s32.totalorder %s10, 1
    %p70 = scmp.ne.s32.totalorder %s65, %s67
    %p71 = scmp.eq.s32.totalorder %s10, 0
    %p72 = por %p70, %p71
    %p73 = scmp.ne.s32.totalorder %s65, %s67
    %p74 = scmp.eq.s32.totalorder %s15, 1
    %p75 = por %p73, %p74
    %p76 = scmp.ne.s32.totalorder %s67, %s68
    %p77 = scmp.eq.s32.totalorder %s15, 0
    %p78 = por %p76, %p77
    %p79 = scmp.ne.s32.totalorder %s67, %s68
    %p80 = scmp.eq.s32.totalorder %s16, 1
    %p81 = por %p79, %p80
    %p83 = scmp.ne.s32.totalorder %s68, %s82
    %p84 = scmp.eq.s32.totalorder %s16, 0
    %p85 = por %p83, %p84
    %s87 = sadd.s32 %s86, 1
    %p90 = scmp.eq.s32.totalorder %s10, 1
    %p91 = scmp.ne.s32.totalorder %s86, %s88
    %p92 = scmp.eq.s32.totalorder %s10, 0
    %p93 = por %p91, %p92
    %p94 = scmp.ne.s32.totalorder %s86, %s88
    %p95 = scmp.eq.s32.totalorder %s15, 1
    %p96 = por %p94, %p95
    %p97 = scmp.ne.s32.totalorder %s88, %s89
    %p98 = scmp.eq.s32.totalorder %s15, 0
    %p99 = por %p97, %p98
    %p100 = scmp.ne.s32.totalorder %s88, %s89
    %p101 = scmp.eq.s32.totalorder %s16, 1
    %p102 = por %p100, %p101
    %p104 = scmp.ne.s32.totalorder %s89, %s103
    %p105 = scmp.eq.s32.totalorder %s16, 0
    %p106 = por %p104, %p105
    %s107 = ssub.s32 %s10, %s17
    %p108 = scmp.eq.s32.totalorder %s107, 0
    %s110 = sadd.s32 %s109, 1
    %s111 = scalar_select %p108, %s109, %s110
    %p114 = pneg %p108
    %p115 = scmp.eq.s32.totalorder %s10, 1
    %p116 = por %p114, %p115
    %p117 = scmp.ne.s32.totalorder %s109, %s112
    %p118 = scmp.eq.s32.totalorder %s10, 0
    %p119 = por %p117, %p118
    %p120 = scmp.ne.s32.totalorder %s109, %s112
    %p121 = scmp.eq.s32.totalorder %s15, 1
    %p122 = por %p120, %p121
    %p123 = scmp.ne.s32.totalorder %s112, %s113
    %p124 = scmp.eq.s32.totalorder %s15, 0
    %p125 = por %p123, %p124
    %p126 = scmp.ne.s32.totalorder %s112, %s113
    %p127 = scmp.eq.s32.totalorder %s16, 1
    %p128 = por %p126, %p127
    %p130 = scmp.ne.s32.totalorder %s113, %s129
    %p131 = scmp.eq.s32.totalorder %s16, 0
    %p132 = por %p130, %p131
    %p133 = scmp.le.s32.totalorder 1, %s10
    %p134 = scmp.lt.s32.totalorder %s10, 3
    %p135 = pnand %p133, %p134
    %p136 = pneg %p135
    // Predicated region
    $region9: #{tpu_custom_call.1} parent=5 // pred_check
      _
    $region10: #{tpu_custom_call.1} parent=5 // pred_check_branch
      %138 = sbr.rel (%p135) target = $region12
    $region11: #{tpu_custom_call.1} parent=5 // pred_region
      %s139 = ssub.s32 %s10, 1
      // Predicated region
      $region13: #{tpu_custom_call.1} parent=11 // pred_check
        %p140 = pneg %p57
      $region14: #{tpu_custom_call.1} parent=11 // pred_check_branch
        %142 = sbr.rel (%p140) target = $region16
      $region15: #{tpu_custom_call.1} parent=11 // pred_region
        _
      $region16: #{tpu_custom_call.1} parent=11 // pred_fallthru
        _
      // Predicated region
      $region17: #{tpu_custom_call.1} parent=11 // pred_check
        %p143 = pneg %p78
      $region18: #{tpu_custom_call.1} parent=11 // pred_check_branch
        %145 = sbr.rel (%p143) target = $region20
      $region19: #{tpu_custom_call.1} parent=11 // pred_region
        _
      $region20: #{tpu_custom_call.1} parent=11 // pred_fallthru
        _
      // Predicated region
      $region21: #{tpu_custom_call.1} parent=11 // pred_check
        %p146 = pneg %p99
      $region22: #{tpu_custom_call.1} parent=11 // pred_check_branch
        %148 = sbr.rel (%p146) target = $region24
      $region23: #{tpu_custom_call.1} parent=11 // pred_region
        _
      $region24: #{tpu_custom_call.1} parent=11 // pred_fallthru
        _
    $region12: #{tpu_custom_call.1} parent=5 // pred_fallthru
      _
    %p149 = scmp.lt.s32.totalorder %s10, 2
    // Predicated region
    $region25: #{tpu_custom_call.1} parent=5 // pred_check
      %p150 = pneg %p149
    $region26: #{tpu_custom_call.1} parent=5 // pred_check_branch
      %152 = sbr.rel (%p150) target = $region28
    $region27: #{tpu_custom_call.1} parent=5 // pred_region
      // Predicated region
      $region29: #{tpu_custom_call.1} parent=27 // pred_check
        %p153 = pneg %p30
      $region30: #{tpu_custom_call.1} parent=27 // pred_check_branch
        %155 = sbr.rel (%p153) target = $region32
      $region31: #{tpu_custom_call.1} parent=27 // pred_region
        %s156 = smul.u32 8, %s10
        %p157 = scmp.lt.s32.totalorder %s156, 15
        %s158 = scalar_select %p157, %s156, 15
        %s159 = smul.addr %s158, 8
        %s160 = scalar_lea.vmem %s0, %s159
        %s161 = smul.u32 8, %s10
      $region32: #{tpu_custom_call.1} parent=27 // pred_fallthru
        _
    $region28: #{tpu_custom_call.1} parent=5 // pred_fallthru
      _
    %p162 = scmp.le.s32.totalorder 1, %s10
    %p163 = scmp.lt.s32.totalorder %s10, 3
    %p164 = pnand %p162, %p163
    %p165 = pneg %p164
    // Predicated region
    $region33: #{tpu_custom_call.1} parent=5 // pred_check
      _
    $region34: #{tpu_custom_call.1} parent=5 // pred_check_branch
      %167 = sbr.rel (%p164) target = $region36
    $region35: #{tpu_custom_call.1} parent=5 // pred_region
      %s168 = ssub.s32 %s10, 1
      %s169 = smul.u32 8, %s15
      %p170 = scmp.lt.s32.totalorder %s169, 15
      %s171 = scalar_select %p170, %s169, 15
      %s172 = smul.addr %s171, 8
      %s173 = scalar_lea.vmem %s0, %s172
      %p174 = pneg %p36
      %p175 = pneg %p33
      %p176 = pneg %p57
      %p177 = pneg %p54
      %p178 = pneg %p78
      %p179 = pneg %p75
      %p180 = pneg %p99
      %p181 = pneg %p96
      %p182 = pneg %p125
      %p183 = pneg %p122
      %s184 = smul.u32 8, %s15
      %p185 = scmp.lt.s32.totalorder %s184, 15
      %s186 = scalar_select %p185, %s184, 15
      %s187 = smul.addr %s186, 4
      %s188 = scalar_lea.vmem %s4, %s187
      %s189 = smul.u32 8, %s15
      %p190 = scmp.lt.s32.totalorder %s189, 15
      %s191 = scalar_select %p190, %s189, 15
      %s192 = smul.addr %s191, 8
      %s193 = scalar_lea.vmem %s0, %s192
      %s194 = smul.u32 8, %s15
      %s195 = smul.u32 8, %s15
      %p196 = scmp.lt.s32.totalorder %s195, 15
      %s197 = scalar_select %p196, %s195, 15
      %s198 = smul.addr %s197, 4
      %s199 = scalar_lea.vmem %s4, %s198
      %s200 = smul.u32 8, %s15
      %v202 = vld [vmem:[%s193] sm:$0xff]
      %v203 = vld [vmem:[%s193 + $0x8] sm:$0xff]
      %v204 = vld [vmem:[%s193 + $0x10] sm:$0xff]
      %v205 = vld [vmem:[%s193 + $0x18] sm:$0xff]
      %v206 = vld [vmem:[%s193 + $0x20] sm:$0xff]
      %v207 = vld [vmem:[%s193 + $0x28] sm:$0xff]
      %v208 = vld [vmem:[%s193 + $0x30] sm:$0xff]
      %v209 = vld [vmem:[%s193 + $0x38] sm:$0xff]
      %v210 = vpack.c.bf16 %v203, %v202
      %v211 = vpack.c.bf16 %v205, %v204
      %v212 = vpack.c.bf16 %v207, %v206
      %v213 = vpack.c.bf16 %v209, %v208
      %v214 = vld [vmem:[%s1] sm:$0xf]
      %v215 = vld [vmem:[%s1 + $0x4] sm:$0xf]
      %v216 = vld [vmem:[%s1 + $0x8] sm:$0xf]
      %v217 = vld [vmem:[%s1 + $0xc] sm:$0xf]
      %v218 = vld [vmem:[%s2] sm:$0x1]
      %v220 = vlaneseq
      %v221 = vshrl.u32 %v220, 7
      %v222 = vsub.s32 0, %v221
      %v223 = vrot.slane %v218, %v222
      %v229 = vunpack.c.l.b16 %v214
      %v230 = vunpack.c.l.b16 %v215
      %v231 = vunpack.c.l.b16 %v216
      %v232 = vunpack.c.l.b16 %v217
      %v233 = vpack.c.b16 %v230, %v229
      %v234 = vpack.c.b16 %v232, %v231
      %vm237 = vcmask 261120
      %v239 = vsel %vm237, %v210, 0
      %v242 = vsel %vm237, %v211, 0
      %v245 = vsel %vm237, %v212, 0
      %v248 = vsel %vm237, %v213, 0
      %250 = vmatprep.subr.bf16.mxu0 0
      %251 = vmatpush1.bf16.msra.mxu0 0
      %252 = vmatprep.subr.bf16.mxu0 0
      %253 = vmatpush1.bf16.msra.mxu0 0
      %254 = vmatprep.subr.bf16.mxu0 0
      %255 = vmatpush1.bf16.msra.mxu0 0
      %256 = vmatprep.subr.bf16.mxu0 0
      %257 = vmatpush1.bf16.msra.mxu0 0
      %258 = vmatprep.subr.bf16.mxu0 0
      %259 = vmatpush1.bf16.msra.mxu0 0
      %260 = vmatprep.subr.bf16.mxu0 0
      %261 = vmatpush1.bf16.msra.mxu0 0
      %262 = vmatprep.subr.bf16.mxu0 0
      %263 = vmatpush1.bf16.msra.mxu0 %v234
      %264 = vmatprep.subr.bf16.mxu0 0
      %265 = vmatpush1.bf16.msra.mxu0 %v233
      %266 = vmatprep.subr.bf16.mxu0 0
      %267 = vmatpush2.bf16.msra.mxu0 0
      %268 = vmatprep.subr.bf16.mxu0 0
      %269 = vmatpush2.bf16.msra.mxu0 0
      %270 = vmatprep.subr.bf16.mxu0 0
      %271 = vmatpush2.bf16.msra.mxu0 0
      %272 = vmatprep.subr.bf16.mxu0 0
      %273 = vmatpush2.bf16.msra.mxu0 0
      %274 = vmatprep.subr.bf16.mxu0 0
      %275 = vmatpush2.bf16.msra.mxu0 0
      %276 = vmatprep.subr.bf16.mxu0 0
      %277 = vmatpush2.bf16.msra.mxu0 0
      %278 = vmatprep.subr.bf16.mxu0 0
      %279 = vmatpush2.bf16.msra.mxu0 0
      %280 = vmatprep.subr.bf16.mxu0 0
      %281 = vmatpush2.bf16.msra.mxu0 0
      %282 = vmatprep.mubr.bf16.mxu0 0
      %283 = vmatmul.mubr.bf16.gmra.mxu0 %v239
      %v284 = vpop.f32.mrf.mxu0
      %v285 = vadd.f32 %v223, %v284
      %v286 = vpop.f32.mrf.mxu0
      %v287 = vpop.f32.mrf.mxu0
      %v288 = vadd.f32 %v223, %v287
      %v289 = vpop.f32.mrf.mxu0
      %290 = vmatprep.mubr.bf16.mxu0 0
      %291 = vmatmul.mubr.bf16.gmra.mxu0 %v242
      %v292 = vpop.f32.mrf.mxu0
      %v293 = vadd.f32 %v223, %v292
      %v294 = vpop.f32.mrf.mxu0
      %v295 = vpop.f32.mrf.mxu0
      %v296 = vadd.f32 %v223, %v295
      %v297 = vpop.f32.mrf.mxu0
      %298 = vmatprep.mubr.bf16.mxu0 0
      %299 = vmatmul.mubr.bf16.gmra.mxu0 %v245
      %v300 = vpop.f32.mrf.mxu0
      %v301 = vadd.f32 %v223, %v300
      %v302 = vpop.f32.mrf.mxu0
      %v303 = vpop.f32.mrf.mxu0
      %v304 = vadd.f32 %v223, %v303
      %v305 = vpop.f32.mrf.mxu0
      %306 = vmatprep.mubr.bf16.mxu0 0
      %307 = vmatmul.mubr.bf16.gmra.mxu0 %v248
      %v308 = vpop.f32.mrf.mxu0
      %v309 = vadd.f32 %v223, %v308
      %v310 = vpop.f32.mrf.mxu0
      %v311 = vpop.f32.mrf.mxu0
      %v312 = vadd.f32 %v223, %v311
      %v313 = vpop.f32.mrf.mxu0
      %314 = vdwg.mxu0
      %v315 = vld [vmem:[%s3] sm:$0xff]
      %v316 = vld [vmem:[%s3 + $0x8] sm:$0xff]
      %v317 = vld [vmem:[%s3 + $0x10] sm:$0xff]
      %v318 = vld [vmem:[%s3 + $0x18] sm:$0xff]
      %v319 = vld [vmem:[%s3 + $0x20] sm:$0xff]
      %v320 = vld [vmem:[%s3 + $0x28] sm:$0xff]
      %v321 = vld [vmem:[%s3 + $0x30] sm:$0xff]
      %v322 = vld [vmem:[%s3 + $0x38] sm:$0xff]
      %v323 = vmul.f32 %v285, %v315
      %v324 = vmul.f32 %v288, %v316
      %v325 = vmul.f32 %v293, %v317
      %v326 = vmul.f32 %v296, %v318
      %v327 = vmul.f32 %v301, %v319
      %v328 = vmul.f32 %v304, %v320
      %v329 = vmul.f32 %v309, %v321
      %v330 = vmul.f32 %v312, %v322
      %339 = vrot.lane.b32.xlu0 %v323, 120
      %v340 = vpop.permute.xlu0 %339
      %341 = vrot.lane.b32.xlu0 %v324, 120
      %v342 = vpop.permute.xlu0 %341
      %343 = vrot.lane.b32.xlu0 %v325, 120
      %v344 = vpop.permute.xlu0 %343
      %345 = vrot.lane.b32.xlu0 %v326, 120
      %v346 = vpop.permute.xlu0 %345
      %347 = vrot.lane.b32.xlu0 %v327, 120
      %v348 = vpop.permute.xlu0 %347
      %349 = vrot.lane.b32.xlu0 %v328, 120
      %v350 = vpop.permute.xlu0 %349
      %351 = vrot.lane.b32.xlu0 %v329, 120
      %v352 = vpop.permute.xlu0 %351
      %353 = vrot.lane.b32.xlu0 %v330, 120
      %v354 = vpop.permute.xlu0 %353
      %v363 = vsub.f32 %v323, %v340
      %v364 = vsub.f32 %v324, %v342
      %v365 = vsub.f32 %v325, %v344
      %v366 = vsub.f32 %v326, %v346
      %v367 = vsub.f32 %v327, %v348
      %v368 = vsub.f32 %v328, %v350
      %v369 = vsub.f32 %v329, %v352
      %v370 = vsub.f32 %v330, %v354
      %379 = vrot.lane.b32.xlu0 %v315, 120
      %v380 = vpop.permute.xlu0 %379
      %381 = vrot.lane.b32.xlu0 %v316, 120
      %v382 = vpop.permute.xlu0 %381
      %383 = vrot.lane.b32.xlu0 %v317, 120
      %v384 = vpop.permute.xlu0 %383
      %385 = vrot.lane.b32.xlu0 %v318, 120
      %v386 = vpop.permute.xlu0 %385
      %387 = vrot.lane.b32.xlu0 %v319, 120
      %v388 = vpop.permute.xlu0 %387
      %389 = vrot.lane.b32.xlu0 %v320, 120
      %v390 = vpop.permute.xlu0 %389
      %391 = vrot.lane.b32.xlu0 %v321, 120
      %v392 = vpop.permute.xlu0 %391
      %393 = vrot.lane.b32.xlu0 %v322, 120
      %v394 = vpop.permute.xlu0 %393
      %v403 = vmul.f32 %v285, %v380
      %v404 = vmul.f32 %v288, %v382
      %v405 = vmul.f32 %v293, %v384
      %v406 = vmul.f32 %v296, %v386
      %v407 = vmul.f32 %v301, %v388
      %v408 = vmul.f32 %v304, %v390
      %v409 = vmul.f32 %v309, %v392
      %v410 = vmul.f32 %v312, %v394
      %411 = vrot.lane.b32.xlu0 %v315, 8
      %v412 = vpop.permute.xlu0 %411
      %413 = vrot.lane.b32.xlu0 %v316, 8
      %v414 = vpop.permute.xlu0 %413
      %415 = vrot.lane.b32.xlu0 %v317, 8
      %v416 = vpop.permute.xlu0 %415
      %417 = vrot.lane.b32.xlu0 %v318, 8
      %v418 = vpop.permute.xlu0 %417
      %419 = vrot.lane.b32.xlu0 %v319, 8
      %v420 = vpop.permute.xlu0 %419
      %421 = vrot.lane.b32.xlu0 %v320, 8
      %v422 = vpop.permute.xlu0 %421
      %423 = vrot.lane.b32.xlu0 %v321, 8
      %v424 = vpop.permute.xlu0 %423
      %425 = vrot.lane.b32.xlu0 %v322, 8
      %v426 = vpop.permute.xlu0 %425
      %v435 = vmul.f32 %v285, %v412
      %v436 = vmul.f32 %v288, %v414
      %v437 = vmul.f32 %v293, %v416
      %v438 = vmul.f32 %v296, %v418
      %v439 = vmul.f32 %v301, %v420
      %v440 = vmul.f32 %v304, %v422
      %v441 = vmul.f32 %v309, %v424
      %v442 = vmul.f32 %v312, %v426
      %451 = vrot.lane.b32.xlu0 %v435, 120
      %v452 = vpop.permute.xlu0 %451
      %453 = vrot.lane.b32.xlu0 %v436, 120
      %v454 = vpop.permute.xlu0 %453
      %455 = vrot.lane.b32.xlu0 %v437, 120
      %v456 = vpop.permute.xlu0 %455
      %457 = vrot.lane.b32.xlu0 %v438, 120
      %v458 = vpop.permute.xlu0 %457
      %459 = vrot.lane.b32.xlu0 %v439, 120
      %v460 = vpop.permute.xlu0 %459
      %461 = vrot.lane.b32.xlu0 %v440, 120
      %v462 = vpop.permute.xlu0 %461
      %463 = vrot.lane.b32.xlu0 %v441, 120
      %v464 = vpop.permute.xlu0 %463
      %465 = vrot.lane.b32.xlu0 %v442, 120
      %v466 = vpop.permute.xlu0 %465
      %v475 = vadd.f32 %v403, %v452
      %v476 = vadd.f32 %v404, %v454
      %v477 = vadd.f32 %v405, %v456
      %v478 = vadd.f32 %v406, %v458
      %v479 = vadd.f32 %v407, %v460
      %v480 = vadd.f32 %v408, %v462
      %v481 = vadd.f32 %v409, %v464
      %v482 = vadd.f32 %v410, %v466
      %483 = vrot.lane.b32.xlu0 %v315, 16
      %v484 = vpop.permute.xlu0 %483
      %485 = vrot.lane.b32.xlu0 %v316, 16
      %v486 = vpop.permute.xlu0 %485
      %487 = vrot.lane.b32.xlu0 %v317, 16
      %v488 = vpop.permute.xlu0 %487
      %489 = vrot.lane.b32.xlu0 %v318, 16
      %v490 = vpop.permute.xlu0 %489
      %491 = vrot.lane.b32.xlu0 %v319, 16
      %v492 = vpop.permute.xlu0 %491
      %493 = vrot.lane.b32.xlu0 %v320, 16
      %v494 = vpop.permute.xlu0 %493
      %495 = vrot.lane.b32.xlu0 %v321, 16
      %v496 = vpop.permute.xlu0 %495
      %497 = vrot.lane.b32.xlu0 %v322, 16
      %v498 = vpop.permute.xlu0 %497
      %v507 = vmul.f32 %v285, %v484
      %v508 = vmul.f32 %v288, %v486
      %v509 = vmul.f32 %v293, %v488
      %v510 = vmul.f32 %v296, %v490
      %v511 = vmul.f32 %v301, %v492
      %v512 = vmul.f32 %v304, %v494
      %v513 = vmul.f32 %v309, %v496
      %v514 = vmul.f32 %v312, %v498
      %523 = vrot.lane.b32.xlu0 %v507, 120
      %v524 = vpop.permute.xlu0 %523
      %525 = vrot.lane.b32.xlu0 %v508, 120
      %v526 = vpop.permute.xlu0 %525
      %527 = vrot.lane.b32.xlu0 %v509, 120
      %v528 = vpop.permute.xlu0 %527
      %529 = vrot.lane.b32.xlu0 %v510, 120
      %v530 = vpop.permute.xlu0 %529
      %531 = vrot.lane.b32.xlu0 %v511, 120
      %v532 = vpop.permute.xlu0 %531
      %533 = vrot.lane.b32.xlu0 %v512, 120
      %v534 = vpop.permute.xlu0 %533
      %535 = vrot.lane.b32.xlu0 %v513, 120
      %v536 = vpop.permute.xlu0 %535
      %537 = vrot.lane.b32.xlu0 %v514, 120
      %v538 = vpop.permute.xlu0 %537
      %v547 = vsub.f32 %v507, %v524
      %v548 = vsub.f32 %v508, %v526
      %v549 = vsub.f32 %v509, %v528
      %v550 = vsub.f32 %v510, %v530
      %v551 = vsub.f32 %v511, %v532
      %v552 = vsub.f32 %v512, %v534
      %v553 = vsub.f32 %v513, %v536
      %v554 = vsub.f32 %v514, %v538
      %555 = vrot.lane.b32.xlu0 %v315, 24
      %v556 = vpop.permute.xlu0 %555
      %557 = vrot.lane.b32.xlu0 %v316, 24
      %v558 = vpop.permute.xlu0 %557
      %559 = vrot.lane.b32.xlu0 %v317, 24
      %v560 = vpop.permute.xlu0 %559
      %561 = vrot.lane.b32.xlu0 %v318, 24
      %v562 = vpop.permute.xlu0 %561
      %563 = vrot.lane.b32.xlu0 %v319, 24
      %v564 = vpop.permute.xlu0 %563
      %565 = vrot.lane.b32.xlu0 %v320, 24
      %v566 = vpop.permute.xlu0 %565
      %567 = vrot.lane.b32.xlu0 %v321, 24
      %v568 = vpop.permute.xlu0 %567
      %569 = vrot.lane.b32.xlu0 %v322, 24
      %v570 = vpop.permute.xlu0 %569
      %v579 = vmul.f32 %v285, %v556
      %v580 = vmul.f32 %v288, %v558
      %v581 = vmul.f32 %v293, %v560
      %v582 = vmul.f32 %v296, %v562
      %v583 = vmul.f32 %v301, %v564
      %v584 = vmul.f32 %v304, %v566
      %v585 = vmul.f32 %v309, %v568
      %v586 = vmul.f32 %v312, %v570
      %595 = vrot.lane.b32.xlu0 %v579, 120
      %v596 = vpop.permute.xlu0 %595
      %597 = vrot.lane.b32.xlu0 %v580, 120
      %v598 = vpop.permute.xlu0 %597
      %599 = vrot.lane.b32.xlu0 %v581, 120
      %v600 = vpop.permute.xlu0 %599
      %601 = vrot.lane.b32.xlu0 %v582, 120
      %v602 = vpop.permute.xlu0 %601
      %603 = vrot.lane.b32.xlu0 %v583, 120
      %v604 = vpop.permute.xlu0 %603
      %605 = vrot.lane.b32.xlu0 %v584, 120
      %v606 = vpop.permute.xlu0 %605
      %607 = vrot.lane.b32.xlu0 %v585, 120
      %v608 = vpop.permute.xlu0 %607
      %609 = vrot.lane.b32.xlu0 %v586, 120
      %v610 = vpop.permute.xlu0 %609
      %v619 = vadd.f32 %v435, %v596
      %v620 = vadd.f32 %v436, %v598
      %v621 = vadd.f32 %v437, %v600
      %v622 = vadd.f32 %v438, %v602
      %v623 = vadd.f32 %v439, %v604
      %v624 = vadd.f32 %v440, %v606
      %v625 = vadd.f32 %v441, %v608
      %v626 = vadd.f32 %v442, %v610
      %635 = vrot.lane.b32.xlu0 %v475, 8
      %v636 = vpop.permute.xlu0 %635
      %637 = vrot.lane.b32.xlu0 %v476, 8
      %v638 = vpop.permute.xlu0 %637
      %639 = vrot.lane.b32.xlu0 %v477, 8
      %v640 = vpop.permute.xlu0 %639
      %641 = vrot.lane.b32.xlu0 %v478, 8
      %v642 = vpop.permute.xlu0 %641
      %643 = vrot.lane.b32.xlu0 %v479, 8
      %v644 = vpop.permute.xlu0 %643
      %645 = vrot.lane.b32.xlu0 %v480, 8
      %v646 = vpop.permute.xlu0 %645
      %647 = vrot.lane.b32.xlu0 %v481, 8
      %v648 = vpop.permute.xlu0 %647
      %649 = vrot.lane.b32.xlu0 %v482, 8
      %v650 = vpop.permute.xlu0 %649
      %667 = vrot.lane.b32.xlu0 %v619, 8
      %v668 = vpop.permute.xlu0 %667
      %669 = vrot.lane.b32.xlu0 %v620, 8
      %v670 = vpop.permute.xlu0 %669
      %671 = vrot.lane.b32.xlu0 %v621, 8
      %v672 = vpop.permute.xlu0 %671
      %673 = vrot.lane.b32.xlu0 %v622, 8
      %v674 = vpop.permute.xlu0 %673
      %675 = vrot.lane.b32.xlu0 %v623, 8
      %v676 = vpop.permute.xlu0 %675
      %677 = vrot.lane.b32.xlu0 %v624, 8
      %v678 = vpop.permute.xlu0 %677
      %679 = vrot.lane.b32.xlu0 %v625, 8
      %v680 = vpop.permute.xlu0 %679
      %681 = vrot.lane.b32.xlu0 %v626, 8
      %v682 = vpop.permute.xlu0 %681
      %vm691 = vcmask 64512
      %v692 = vsel %vm691, %v363, %v636
      %v693 = vsel %vm691, %v364, %v638
      %v694 = vsel %vm691, %v365, %v640
      %v695 = vsel %vm691, %v366, %v642
      %v696 = vsel %vm691, %v367, %v644
      %v697 = vsel %vm691, %v368, %v646
      %v698 = vsel %vm691, %v369, %v648
      %v699 = vsel %vm691, %v370, %v650
      %vm700 = vcmask 130048
      %v701 = vsel %vm700, %v692, %v547
      %v702 = vsel %vm700, %v693, %v548
      %v703 = vsel %vm700, %v694, %v549
      %v704 = vsel %vm700, %v695, %v550
      %v705 = vsel %vm700, %v696, %v551
      %v706 = vsel %vm700, %v697, %v552
      %v707 = vsel %vm700, %v698, %v553
      %v708 = vsel %vm700, %v699, %v554
      %vm709 = vcmask 195584
      %v710 = vsel %vm709, %v701, %v668
      %v711 = vsel %vm709, %v702, %v670
      %v712 = vsel %vm709, %v703, %v672
      %v713 = vsel %vm709, %v704, %v674
      %v714 = vsel %vm709, %v705, %v676
      %v715 = vsel %vm709, %v706, %v678
      %v716 = vsel %vm709, %v707, %v680
      %v717 = vsel %vm709, %v708, %v682
      %v718 = vpack.c.bf16 %v711, %v710
      %v719 = vpack.c.bf16 %v713, %v712
      %v720 = vpack.c.bf16 %v715, %v714
      %v721 = vpack.c.bf16 %v717, %v716
      %v726 = vunpack.c.l.b16 %v718
      %v727 = vunpack.c.h.b16 %v718
      %v728 = vunpack.c.l.b16 %v719
      %v729 = vunpack.c.h.b16 %v719
      %v730 = vunpack.c.l.b16 %v720
      %v731 = vunpack.c.h.b16 %v720
      %v732 = vunpack.c.l.b16 %v721
      %v733 = vunpack.c.h.b16 %v721
      %v734 = vpack.c.b16 %v726, %v726
      %v735 = vpack.c.b16 %v727, %v727
      %v736 = vpack.c.b16 %v728, %v728
      %v737 = vpack.c.b16 %v729, %v729
      %v738 = vpack.c.b16 %v730, %v730
      %v739 = vpack.c.b16 %v731, %v731
      %v740 = vpack.c.b16 %v732, %v732
      %v741 = vpack.c.b16 %v733, %v733
      %vm750 = vcmask 257024
      %751 = vst.msk [vmem:[%s199] sm:$0xf] %vm750, %v734
      %752 = vst.msk [vmem:[%s199 + $0x4] sm:$0xf] %vm750, %v735
      %753 = vst.msk [vmem:[%s199 + $0x8] sm:$0xf] %vm750, %v736
      %754 = vst.msk [vmem:[%s199 + $0xc] sm:$0xf] %vm750, %v737
      %755 = vst.msk [vmem:[%s199 + $0x10] sm:$0xf] %vm750, %v738
      %756 = vst.msk [vmem:[%s199 + $0x14] sm:$0xf] %vm750, %v739
      %757 = vst.msk [vmem:[%s199 + $0x18] sm:$0xf] %vm750, %v740
      %758 = vst.msk [vmem:[%s199 + $0x1c] sm:$0xf] %vm750, %v741
      %s759 = smul.u32 8, %s15
      %p760 = scmp.lt.s32.totalorder %s759, 15
      %s761 = scalar_select %p760, %s759, 15
      %s762 = smul.addr %s761, 4
      %s763 = scalar_lea.vmem %s4, %s762
      // Predicated region
      $region37: #{tpu_custom_call.1} parent=35 // pred_check
        %p764 = pneg %p122
      $region38: #{tpu_custom_call.1} parent=35 // pred_check_branch
        %766 = sbr.rel (%p764) target = $region40
      $region39: #{tpu_custom_call.1} parent=35 // pred_region
        %s767 = smul.u32 8, %s15
      $region40: #{tpu_custom_call.1} parent=35 // pred_fallthru
        _
    $region36: #{tpu_custom_call.1} parent=5 // pred_fallthru
      _
    %p768 = scmp.le.s32.totalorder 2, %s10
    // Predicated region
    $region41: #{tpu_custom_call.1} parent=5 // pred_check
      %p769 = pneg %p768
    $region42: #{tpu_custom_call.1} parent=5 // pred_check_branch
      %771 = sbr.rel (%p769) target = $region44
    $region43: #{tpu_custom_call.1} parent=5 // pred_region
      %s772 = ssub.s32 %s10, 2
      // Predicated region
      $region45: #{tpu_custom_call.1} parent=43 // pred_check
        %p773 = pneg %p128
      $region46: #{tpu_custom_call.1} parent=43 // pred_check_branch
        %775 = sbr.rel (%p773) target = $region48
      $region47: #{tpu_custom_call.1} parent=43 // pred_region
        %s776 = smul.u32 8, %s16
        %p777 = scmp.lt.s32.totalorder %s776, 15
        %s778 = scalar_select %p777, %s776, 15
        %s779 = smul.addr %s778, 4
        %s780 = scalar_lea.vmem %s4, %s779
      $region48: #{tpu_custom_call.1} parent=43 // pred_fallthru
        _
    $region44: #{tpu_custom_call.1} parent=5 // pred_fallthru
      _
  $region6: #{tpu_custom_call.1} parent=0 // loop_footer
    %s14 = sadd.s32 1, %s10
  $region7: #{tpu_custom_call.1} parent=0 // loop_footer_branch
    %9 = sbr.rel target = $region3
  $region8: #{tpu_custom_call.1} parent=0 // loop_exit
    _

</llo_original>
